<compile_context>
chip_gen: v7x
topology: tpu7x:2x2x1
jax: 0.10.0
libtpu: 0.0.40
codegen_flags: <defaults>
</compile_context>

<pallas_src>
import math

import jax
import jax.numpy as jnp
from jax.experimental import pallas as pl
from jax.experimental.pallas import tpu as pltpu

LN_EPS = 1e-6                      # timm LayerNorm2d default eps (norm_eps=None)
MATMUL_DTYPE = jnp.bfloat16        # MXU operand dtype; accumulation stays f32

_PARALLEL1 = pltpu.CompilerParams(dimension_semantics=("parallel",))
_VMEM_TILE_BUDGET = 8 * 1024 * 1024  # bytes per activation block (double-buffer headroom)


def _pick_tile(m, row_bytes):
    """Largest row tile that divides m and respects a per-block VMEM budget."""
    cap = max(8, _VMEM_TILE_BUDGET // max(int(row_bytes), 1))
    for d in (2048, 1024, 512, 256, 128, 64, 32, 16, 8):
        if m % d == 0 and d <= cap:
            return d
    return m  # small / awkward M -> single block (all shapes here divide cleanly)


# ----------------------------------------------------------------------------
# GELU: nn.GELU() default is the exact (erf) formulation.  Probe lazily whether
# erf lowers on this backend; otherwise fall back to tanh approximation.
# ----------------------------------------------------------------------------
_GELU_MODE = [None]  # None = unknown, True = erf ok, False = tanh fallback


def _probe_erf():
    def k(x_ref, o_ref):
        o_ref[...] = jax.lax.erf(x_ref[...])

    try:
        out = pl.pallas_call(
            k, out_shape=jax.ShapeDtypeStruct((8, 128), jnp.float32)
        )(jnp.zeros((8, 128), jnp.float32))
        jax.block_until_ready(out)
        return True
    except Exception:
        return False


def _ensure_gelu_mode():
    if _GELU_MODE[0] is None:
        _GELU_MODE[0] = _probe_erf()
    return _GELU_MODE[0]


def _gelu(x):
    if _GELU_MODE[0]:
        return 0.5 * x * (1.0 + jax.lax.erf(x * 0.7071067811865476))
    # TODO(synk): exact erf-GELU not lowerable on this backend; tanh approximation used.
    return jax.nn.gelu(x, approximate=True)


# ----------------------------------------------------------------------------
# Stem: patchify conv (as matmul) + LayerNorm2d, fused
# ----------------------------------------------------------------------------
def _stem_kernel(x_ref, w_ref, b_ref, g_ref, bn_ref, o_ref):
    x = x_ref[...].astype(w_ref.dtype)
    y = jnp.dot(x, w_ref[...], preferred_element_type=jnp.float32) + b_ref[...]
    mean = jnp.mean(y, axis=-1, keepdims=True)
    var = jnp.mean(jnp.square(y - mean), axis=-1, keepdims=True)
    o_ref[...] = (y - mean) * jax.lax.rsqrt(var + LN_EPS) * g_ref[...] + bn_ref[...]


def stem_forward(patches, sp):
    M, K = patches.shape
    C = sp["w"].shape[1]
    tm = _pick_tile(M, 4 * max(K, C))
    return pl.pallas_call(
        _stem_kernel,
        out_shape=jax.ShapeDtypeStruct((M, C), jnp.float32),
        grid=(M // tm,),
        in_specs=[
            pl.BlockSpec((tm, K), lambda i: (i, 0)),
            pl.BlockSpec((K, C), lambda i: (0, 0)),
            pl.BlockSpec((1, C), lambda i: (0, 0)),
            pl.BlockSpec((1, C), lambda i: (0, 0)),
            pl.BlockSpec((1, C), lambda i: (0, 0)),
        ],
        out_specs=pl.BlockSpec((tm, C), lambda i: (i, 0)),
        compiler_params=_PARALLEL1,
    )(patches, sp["w"], sp["b"], sp["ln_g"], sp["ln_b"])


# ----------------------------------------------------------------------------
# Transition: LayerNorm2d + Conv (k=1 or k=2 stride 2), fused.
# For k=2 the input is patchified to (M, 4*C); LN is applied per C-sized chunk
# (equivalent to per-pixel LN before the strided conv).
# ----------------------------------------------------------------------------
def _make_ln_matmul_kernel(kk, C):
    def kernel(x_ref, g_ref, bn_ref, w_ref, b_ref, o_ref):
        x = x_ref[...]
        if kk == 1:
            mean = jnp.mean(x, axis=-1, keepdims=True)
            var = jnp.mean(jnp.square(x - mean), axis=-1, keepdims=True)
        else:
            lane = jax.lax.broadcasted_iota(jnp.int32, (1, kk * C), 1) // C
            mean = jnp.zeros_like(x)
            var = jnp.zeros_like(x)
            for j in range(kk):
                xj = x[:, j * C:(j + 1) * C]
                m = jnp.mean(xj, axis=-1, keepdims=True)
                v = jnp.mean(jnp.square(xj - m), axis=-1, keepdims=True)
                sel = lane == j
                mean = jnp.where(sel, m, mean)
                var = jnp.where(sel, v, var)
        xn = (x - mean) * jax.lax.rsqrt(var + LN_EPS) * g_ref[...] + bn_ref[...]
        o_ref[...] = (
            jnp.dot(xn.astype(w_ref.dtype), w_ref[...],
                    preferred_element_type=jnp.float32) + b_ref[...]
        )

    return kernel


def transition_forward(x, t, N, H, W):
    """x: (N*H*W, C) pixel rows.  Returns ((M', Cout), H', W')."""
    C = x.shape[-1]
    k = t["k"]
    kk = k * k
    if k == 2:
        x4 = x.reshape(N, H, W, C)
        xin, H, W = _patchify(x4, 2)
        g = jnp.tile(t["ln_g"], (1, kk))
        bn = jnp.tile(t["ln_b"], (1, kk))
    else:
        xin, g, bn = x, t["ln_g"], t["ln_b"]
    M, K = xin.shape
    Cout = t["w"].shape[1]
    tm = _pick_tile(M, 4 * max(K, Cout))
    out = pl.pallas_call(
        _make_ln_matmul_kernel(kk, C),
        out_shape=jax.ShapeDtypeStruct((M, Cout), jnp.float32),
        grid=(M // tm,),
        in_specs=[
            pl.BlockSpec((tm, K), lambda i: (i, 0)),
            pl.BlockSpec((1, K), lambda i: (0, 0)),
            pl.BlockSpec((1, K), lambda i: (0, 0)),
            pl.BlockSpec((K, Cout), lambda i: (0, 0)),
            pl.BlockSpec((1, Cout), lambda i: (0, 0)),
        ],
        out_specs=pl.BlockSpec((tm, Cout), lambda i: (i, 0)),
        compiler_params=_PARALLEL1,
    )(xin, g, bn, t["w"], t["b"])
    return out, H, W


# ----------------------------------------------------------------------------
# Fused DenseBlock:
#   concat-passthrough + dwconv7x7 + LN + 1x1 + GELU + 1x1 [+ ESE] + gamma
# Grid over N (one image per step); halo built in a flattened VMEM scratch.
# ----------------------------------------------------------------------------
def _make_dense_block_kernel(H, W, Cin, growth, use_ese, S, R):
    HW = H * W

    def kernel(*refs):
        if use_ese:
            (x_ref, dww_ref, dwb_ref, g_ref, bn_ref, w1_ref, b1_ref,
             w2_ref, b2_ref, gamma_ref, sew_ref, seb_ref, o_ref, xp_ref) = refs
        else:
            (x_ref, dww_ref, dwb_ref, g_ref, bn_ref, w1_ref, b1_ref,
             w2_ref, b2_ref, gamma_ref, o_ref, xp_ref) = refs
            sew_ref = seb_ref = None

        x = x_ref[0]                                  # (HW, Cin), f32

        # --- depthwise 7x7, stride 1, pad 3: zero halo built in VMEM only ---
        xp_ref[...] = jnp.zeros((R, Cin), jnp.float32)
        xp_ref[S:S + HW, :] = x                       # aligned sublane store

        col = jax.lax.broadcasted_iota(jnp.int32, (HW, 1), 0) % W
        acc = jnp.zeros((HW, Cin), jnp.float32)
        for dy in range(7):
            oy = dy - 3
            for dx in range(7):
                ox = dx - 3
                start = S + oy * W + ox               # flattened spatial shift
                tap = xp_ref[start:start + HW, :]
                if ox != 0:
                    valid = jnp.logical_and(col + ox >= 0, col + ox < W)
                    tap = jnp.where(valid, tap, 0.0)  # mask row wrap-around
                acc = acc + tap * dww_ref[dy, dx, :]
        y = acc + dwb_ref[...]                        # (HW, Cin)

        # --- LayerNorm2d over channels (f32) ---
        mean = jnp.mean(y, axis=-1, keepdims=True)
        var = jnp.mean(jnp.square(y - mean), axis=-1, keepdims=True)
        xn = (y - mean) * jax.lax.rsqrt(var + LN_EPS) * g_ref[...] + bn_ref[...]

        # --- 1x1 -> GELU -> 1x1 (bf16 MXU operands, f32 accumulation) ---
        # TODO(synk): for very wide stages (inter ~4k) split 'inter' onto a grid
        # axis with a VMEM accumulator to stay inside v7x's 64 MiB VMEM.
        h = jnp.dot(xn.astype(w1_ref.dtype), w1_ref[...],
                    preferred_element_type=jnp.float32) + b1_ref[...]
        h = _gelu(h)
        new = jnp.dot(h.astype(w2_ref.dtype), w2_ref[...],
                      preferred_element_type=jnp.float32) + b2_ref[...]

        if use_ese:
            # EffectiveSE: per-image global avg pool -> 1x1 -> hard_sigmoid gate
            se = jnp.mean(new, axis=0, keepdims=True)              # (1, growth)
            se = jnp.dot(se.astype(sew_ref.dtype), sew_ref[...],
                         preferred_element_type=jnp.float32) + seb_ref[...]
            gate = jnp.clip((se + 3.0) / 6.0, 0.0, 1.0)
            new = new * gate

        new = new * gamma_ref[...]                                 # layer scale; DropPath(0)=id

        # fused "concatenate": passthrough + new channels into one wider slab
        o_ref[0, :, :Cin] = x
        o_ref[0, :, Cin:] = new

    return kernel


def dense_block_forward(x3, H, W, blk, use_ese, growth):
    """x3: (N, H*W, Cin) -> (N, H*W, Cin+growth)."""
    N, HW, Cin = x3.shape
    Ctot = Cin + growth
    inter = blk["w1"].shape[1]
    # flattened, zero-padded spatial scratch: x placed at row S, 8-aligned
    S = ((3 * W + 3 + 7) // 8) * 8
    R = ((S + HW + 3 * W + 4 + 7) // 8) * 8

    args = [x3, blk["dw_w"], blk["dw_b"], blk["ln_g"], blk["ln_b"],
            blk["w1"], blk["b1"], blk["w2"], blk["b2"], blk["gamma"]]
    in_specs = [
        pl.BlockSpec((1, HW, Cin), lambda n: (n, 0, 0)),
        pl.BlockSpec((7, 7, Cin), lambda n: (0, 0, 0)),
        pl.BlockSpec((1, Cin), lambda n: (0, 0)),
        pl.BlockSpec((1, Cin), lambda n: (0, 0)),
        pl.BlockSpec((1, Cin), lambda n: (0, 0)),
        pl.BlockSpec((Cin, inter), lambda n: (0, 0)),
        pl.BlockSpec((1, inter), lambda n: (0, 0)),
        pl.BlockSpec((inter, growth), lambda n: (0, 0)),
        pl.BlockSpec((1, growth), lambda n: (0, 0)),
        pl.BlockSpec((1, growth), lambda n: (0, 0)),
    ]
    if use_ese:
        args += [blk["se_w"], blk["se_b"]]
        in_specs += [
            pl.BlockSpec((growth, growth), lambda n: (0, 0)),
            pl.BlockSpec((1, growth), lambda n: (0, 0)),
        ]

    # TODO(synk): for large H*W on v7x, additionally tile over output rows with a
    # 6-row halo instead of one image per grid step.
    return pl.pallas_call(
        _make_dense_block_kernel(H, W, Cin, growth, use_ese, S, R),
        out_shape=jax.ShapeDtypeStruct((N, HW, Ctot), jnp.float32),
        grid=(N,),
        in_specs=in_specs,
        out_specs=pl.BlockSpec((1, HW, Ctot), lambda n: (n, 0, 0)),
        scratch_shapes=[pltpu.VMEM((R, Cin), jnp.float32)],
        compiler_params=_PARALLEL1,
    )(*args)


# ----------------------------------------------------------------------------
# Head (NormMlpClassifierHead): per-image avgpool -> LayerNorm -> Linear, fused
# ----------------------------------------------------------------------------
def _head_kernel(x_ref, g_ref, bn_ref, w_ref, b_ref, o_ref):
    pooled = jnp.mean(x_ref[0], axis=0, keepdims=True)     # (1, C)
    mean = jnp.mean(pooled, axis=-1, keepdims=True)
    var = jnp.mean(jnp.square(pooled - mean), axis=-1, keepdims=True)
    pn = (pooled - mean) * jax.lax.rsqrt(var + LN_EPS) * g_ref[...] + bn_ref[...]
    o_ref[0] = (jnp.dot(pn.astype(w_ref.dtype), w_ref[...],
                        preferred_element_type=jnp.float32) + b_ref[...])


def head_forward(x, hp):
    N, HW, C = x.shape
    NC = hp["w"].shape[1]
    out = pl.pallas_call(
        _head_kernel,
        out_shape=jax.ShapeDtypeStruct((N, 1, NC), jnp.float32),
        grid=(N,),
        in_specs=[
            pl.BlockSpec((1, HW, C), lambda n: (n, 0, 0)),
            pl.BlockSpec((1, C), lambda n: (0, 0)),
            pl.BlockSpec((1, C), lambda n: (0, 0)),
            pl.BlockSpec((C, NC), lambda n: (0, 0)),
            pl.BlockSpec((1, NC), lambda n: (0, 0)),
        ],
        out_specs=pl.BlockSpec((1, 1, NC), lambda n: (n, 0, 0)),
        compiler_params=_PARALLEL1,
    )(x, hp["ln_g"], hp["ln_b"], hp["w"], hp["b"])
    return out.reshape(N, NC)


# ----------------------------------------------------------------------------
# Parameter construction (deterministic, synthetic — shapes follow RDNet.__init__)
# ----------------------------------------------------------------------------
_MASTER_KEY = jax.random.PRNGKey(0)
_KEY_CNT = [0]


def _rand(shape, fan_in=None):
    _KEY_CNT[0] += 1
    k = jax.random.fold_in(_MASTER_KEY, _KEY_CNT[0])
    std = math.sqrt(2.0 / fan_in) if fan_in else 0.02  # kaiming_normal-like
    return (std * jax.random.normal(k, shape)).astype(jnp.float32)


CFG = dict(
    in_chans=3,
    num_classes=10,
    patch_size=4,
    num_init_features=16,
    growth_rates=(8, 16),
    num_blocks_list=(2, 2),
    block_type=("Block", "BlockESE"),
    is_downsample_block=(None, True),
    bottleneck_width_ratio=4.0,
    transition_compression_ratio=0.5,
    ls_init_value=1e-6,
)


def init_params(cfg):
    p = {}
    cin = cfg["in_chans"]
    ps = cfg["patch_size"]
    c0 = cfg["num_init_features"]
    p["stem"] = dict(
        w=_rand((ps * ps * cin, c0), fan_in=ps * ps * cin).astype(MATMUL_DTYPE),
        b=jnp.zeros((1, c0), jnp.float32),
        ln_g=jnp.ones((1, c0), jnp.float32),
        ln_b=jnp.zeros((1, c0), jnp.float32),
    )
    stages = []
    num_features = c0
    for i in range(len(cfg["growth_rates"])):
        st = {}
        if i != 0:
            compressed = int(num_features * cfg["transition_compression_ratio"] / 8) * 8
            k = 2 if cfg["is_downsample_block"][i] else 1
            st["trans"] = dict(
                k=k,
                ln_g=jnp.ones((1, num_features), jnp.float32),
                ln_b=jnp.zeros((1, num_features), jnp.float32),
                w=_rand((k * k * num_features, compressed),
                        fan_in=k * k * num_features).astype(MATMUL_DTYPE),
                b=jnp.zeros((1, compressed), jnp.float32),
            )
            num_features = compressed
        growth = cfg["growth_rates"][i]
        use_ese = cfg["block_type"][i].lower() == "blockese"
        blocks = []
        for bidx in range(cfg["num_blocks_list"][i]):
            cin_b = num_features + bidx * growth
            inter = int(cin_b * cfg["bottleneck_width_ratio"] / 8) * 8
            blk = dict(
                dw_w=_rand((7, 7, cin_b), fan_in=49),            # depthwise 7x7 (f32, VPU)
                dw_b=jnp.zeros((1, cin_b), jnp.float32),
                ln_g=jnp.ones((1, cin_b), jnp.float32),
                ln_b=jnp.zeros((1, cin_b), jnp.float32),
                w1=_rand((cin_b, inter), fan_in=cin_b).astype(MATMUL_DTYPE),
                b1=jnp.zeros((1, inter), jnp.float32),
                w2=_rand((inter, growth), fan_in=inter).astype(MATMUL_DTYPE),
                b2=jnp.zeros((1, growth), jnp.float32),
                gamma=jnp.full((1, growth), cfg["ls_init_value"], jnp.float32),
            )
            if use_ese:
                blk["se_w"] = _rand((growth, growth), fan_in=growth).astype(MATMUL_DTYPE)
                blk["se_b"] = jnp.zeros((1, growth), jnp.float32)
            blocks.append(blk)
        st["blocks"] = blocks
        st["use_ese"] = use_ese
        st["growth"] = growth
        num_features += cfg["num_blocks_list"][i] * growth
        stages.append(st)
    p["stages"] = stages
    p["head"] = dict(
        ln_g=jnp.ones((1, num_features), jnp.float32),
        ln_b=jnp.zeros((1, num_features), jnp.float32),
        w=_rand((num_features, cfg["num_classes"]), fan_in=num_features).astype(MATMUL_DTYPE),
        b=jnp.zeros((1, cfg["num_classes"]), jnp.float32),
    )
    p["num_features"] = num_features
    return p


# ----------------------------------------------------------------------------
# Forward (wrapper glue is only free reshapes/transposes; all compute in Pallas)
# ----------------------------------------------------------------------------
def _patchify(x_nhwc, p):
    N, H, W, C = x_nhwc.shape
    Ho, Wo = H // p, W // p
    x = x_nhwc.reshape(N, Ho, p, Wo, p, C)
    x = jnp.transpose(x, (0, 1, 3, 2, 4, 5))
    return x.reshape(N * Ho * Wo, p * p * C), Ho, Wo


def rdnet_forward(x_nchw, params, cfg):
    _ensure_gelu_mode()
    x = jnp.transpose(x_nchw, (0, 2, 3, 1)).astype(jnp.float32)   # NCHW -> NHWC
    N = x.shape[0]

    # stem: patchify conv + LayerNorm2d (fused)
    patches, H, W = _patchify(x, cfg["patch_size"])
    x = stem_forward(patches, params["stem"])                     # (N*H*W, C0)

    for st in params["stages"]:
        if "trans" in st:
            x, H, W = transition_forward(x, st["trans"], N, H, W)
        x3 = x.reshape(N, H * W, x.shape[-1])
        for blk in st["blocks"]:
            x3 = dense_block_forward(x3, H, W, blk, st["use_ese"], st["growth"])
        x = x3.reshape(N * H * W, x3.shape[-1])

    # norm_pre = Identity (head_norm_first=False)
    logits = head_forward(x.reshape(N, H * W, x.shape[-1]), params["head"])
    return logits


if __name__ == "__main__":
    key = jax.random.PRNGKey(0)
    x = jax.random.normal(key, (2, 3, 32, 32), dtype=jnp.float32)  # NCHW like PyTorch
    params = init_params(CFG)
    logits = rdnet_forward(x, params, CFG)
    logits = jax.block_until_ready(logits)
    assert logits.shape == (2, CFG["num_classes"])
    assert bool(jnp.all(jnp.isfinite(logits)))
    print("KERNEL_OK")
</pallas_src>

<mosaic_0001>
module attributes {stable_mosaic.version = 11 : i64} {
  func.func @k(%arg0: memref<8x128xf32, #tpu.memory_space<vmem>>, %arg1: memref<8x128xf32, #tpu.memory_space<vmem>>) attributes {dimension_semantics = [], scalar_prefetch = 0 : i64, scratch_operands = 0 : i64, tpu.core_type = #tpu.core_type<tc>} {
    %c0 = arith.constant 0 : index
    %c0_0 = arith.constant 0 : index
    %0 = vector.load %arg0[%c0, %c0_0] : memref<8x128xf32, #tpu.memory_space<vmem>>, vector<8x128xf32>
    %1 = math.erf %0 : vector<8x128xf32>
    %c0_1 = arith.constant 0 : index
    %c0_2 = arith.constant 0 : index
    %2 = vector.load %arg1[%c0_1, %c0_2] : memref<8x128xf32, #tpu.memory_space<vmem>>, vector<8x128xf32>
    tpu.vector_store %arg1[%c0_1, %c0_2], %1 {strides = array<i32>} : memref<8x128xf32, #tpu.memory_space<vmem>>, vector<8x128xf32>,
    return
  }
}

module attributes {stable_mosaic.version = 11 : i64} {
  func.func @_stem_kernel(%arg0: i32, %arg1: memref<128x48xf32, #tpu.memory_space<vmem>>, %arg2: memref<48x16xbf16, #tpu.memory_space<vmem>>, %arg3: memref<1x16xf32, #tpu.memory_space<vmem>>, %arg4: memref<1x16xf32, #tpu.memory_space<vmem>>, %arg5: memref<1x16xf32, #tpu.memory_space<vmem>>, %arg6: memref<128x16xf32, #tpu.memory_space<vmem>>) attributes {dimension_semantics = [#tpu.dimension_semantics<parallel>], iteration_bounds = array<i64: 1>, scalar_prefetch = 0 : i64, scratch_operands = 0 : i64, tpu.core_type = #tpu.core_type<tc>, window_params = [{transform_indices = @transform_0, window_bounds = array<i64: 128, 48>}, {pipeline_mode = #tpu.pipeline_mode<synchronous>, transform_indices = @transform_1, window_bounds = array<i64: 48, 16>}, {pipeline_mode = #tpu.pipeline_mode<synchronous>, transform_indices = @transform_2, window_bounds = array<i64: 1, 16>}, {pipeline_mode = #tpu.pipeline_mode<synchronous>, transform_indices = @transform_3, window_bounds = array<i64: 1, 16>}, {pipeline_mode = #tpu.pipeline_mode<synchronous>, transform_indices = @transform_4, window_bounds = array<i64: 1, 16>}, {transform_indices = @transform_5, window_bounds = array<i64: 128, 16>}]} {
    %c0 = arith.constant 0 : index
    %c0_0 = arith.constant 0 : index
    %0 = vector.load %arg1[%c0, %c0_0] : memref<128x48xf32, #tpu.memory_space<vmem>>, vector<128x48xf32>
    %1 = arith.truncf %0 : vector<128x48xf32> to vector<128x48xbf16>
    %c0_1 = arith.constant 0 : index
    %c0_2 = arith.constant 0 : index
    %2 = vector.load %arg2[%c0_1, %c0_2] : memref<48x16xbf16, #tpu.memory_space<vmem>>, vector<48x16xbf16>
    %cst = arith.constant dense<0.000000e+00> : vector<128x16xf32>
    %3 = tpu.matmul %1, %2, %cst {dimension_numbers = #tpu.dot_dimension_numbers<[1], [0], [0], [1], [0, 0, 1, 1], [], []>} : vector<128x48xbf16>, vector<48x16xbf16>, vector<128x16xf32> -> vector<128x16xf32>
    %c0_3 = arith.constant 0 : index
    %c0_4 = arith.constant 0 : index
    %4 = vector.load %arg3[%c0_3, %c0_4] : memref<1x16xf32, #tpu.memory_space<vmem>>, vector<1x16xf32>
    %5 = vector.broadcast %4 : vector<1x16xf32> to vector<128x16xf32>
    %6 = arith.addf %3, %5 : vector<128x16xf32>
    %cst_5 = arith.constant dense<0.000000e+00> : vector<128xf32>
    %7 = vector.multi_reduction <add>, %6, %cst_5 [1] : vector<128x16xf32> to vector<128xf32>
    %8 = vector.shape_cast %7 : vector<128xf32> to vector<128x1xf32>
    %cst_6 = arith.constant 1.600000e+01 : f32
    %9 = vector.broadcast %cst_6 : f32 to vector<128x1xf32>
    %10 = arith.divf %8, %9 : vector<128x1xf32>
    %11 = vector.broadcast %10 : vector<128x1xf32> to vector<128x16xf32>
    %12 = arith.subf %6, %11 : vector<128x16xf32>
    %13 = arith.mulf %12, %12 : vector<128x16xf32>
    %cst_7 = arith.constant dense<0.000000e+00> : vector<128xf32>
    %14 = vector.multi_reduction <add>, %13, %cst_7 [1] : vector<128x16xf32> to vector<128xf32>
    %15 = vector.shape_cast %14 : vector<128xf32> to vector<128x1xf32>
    %cst_8 = arith.constant 1.600000e+01 : f32
    %16 = vector.broadcast %cst_8 : f32 to vector<128x1xf32>
    %17 = arith.divf %15, %16 : vector<128x1xf32>
    %18 = vector.broadcast %10 : vector<128x1xf32> to vector<128x16xf32>
    %19 = arith.subf %6, %18 : vector<128x16xf32>
    %cst_9 = arith.constant 9.99999997E-7 : f32
    %20 = vector.broadcast %cst_9 : f32 to vector<128x1xf32>
    %21 = arith.addf %17, %20 : vector<128x1xf32>
    %22 = math.rsqrt %21 : vector<128x1xf32>
    %23 = vector.broadcast %22 : vector<128x1xf32> to vector<128x16xf32>
    %24 = arith.mulf %19, %23 : vector<128x16xf32>
    %c0_10 = arith.constant 0 : index
    %c0_11 = arith.constant 0 : index
    %25 = vector.load %arg4[%c0_10, %c0_11] : memref<1x16xf32, #tpu.memory_space<vmem>>, vector<1x16xf32>
    %26 = vector.broadcast %25 : vector<1x16xf32> to vector<128x16xf32>
    %27 = arith.mulf %24, %26 : vector<128x16xf32>
    %c0_12 = arith.constant 0 : index
    %c0_13 = arith.constant 0 : index
    %28 = vector.load %arg5[%c0_12, %c0_13] : memref<1x16xf32, #tpu.memory_space<vmem>>, vector<1x16xf32>
    %29 = vector.broadcast %28 : vector<1x16xf32> to vector<128x16xf32>
    %30 = arith.addf %27, %29 : vector<128x16xf32>
    %c0_14 = arith.constant 0 : index
    %c0_15 = arith.constant 0 : index
    %31 = vector.load %arg6[%c0_14, %c0_15] : memref<128x16xf32, #tpu.memory_space<vmem>>, vector<128x16xf32>
    tpu.vector_store %arg6[%c0_14, %c0_15], %30 {strides = array<i32>} : memref<128x16xf32, #tpu.memory_space<vmem>>, vector<128x16xf32>,
    return
  }
  func.func @transform_0(%arg0: i32) -> (i32, i32) {
    %c0_i32 = arith.constant 0 : i32
    %c0_i32_0 = arith.constant 0 : i32
    return %arg0, %c0_i32 : i32, i32
  }
  func.func @transform_1(%arg0: i32) -> (i32, i32) {
    %c0_i32 = arith.constant 0 : i32
    %c0_i32_0 = arith.constant 0 : i32
    %c0_i32_1 = arith.constant 0 : i32
    return %c0_i32, %c0_i32_0 : i32, i32
  }
  func.func @transform_2(%arg0: i32) -> (i32, i32) {
    %c0_i32 = arith.constant 0 : i32
    %c0_i32_0 = arith.constant 0 : i32
    %c0_i32_1 = arith.constant 0 : i32
    return %c0_i32, %c0_i32_0 : i32, i32
  }
  func.func @transform_3(%arg0: i32) -> (i32, i32) {
    %c0_i32 = arith.constant 0 : i32
    %c0_i32_0 = arith.constant 0 : i32
    %c0_i32_1 = arith.constant 0 : i32
    return %c0_i32, %c0_i32_0 : i32, i32
  }
  func.func @transform_4(%arg0: i32) -> (i32, i32) {
    %c0_i32 = arith.constant 0 : i32
    %c0_i32_0 = arith.constant 0 : i32
    %c0_i32_1 = arith.constant 0 : i32
    return %c0_i32, %c0_i32_0 : i32, i32
  }
  func.func @transform_5(%arg0: i32) -> (i32, i32) {
    %c0_i32 = arith.constant 0 : i32
    %c0_i32_0 = arith.constant 0 : i32
    return %arg0, %c0_i32 : i32, i32
  }
}

</mosaic_0001>

<llo_original>
// kernel: tpu_custom_call.1
$region0: #{tpu_custom_call.1}
  #allocation0 [shape = 'u32[]', space=smem, size = 0x4, offset = 0x4, fixed_abs, tag = 'smem constant byte address 0x4 - core index']
  #allocation1 [shape = 'u32[144,128]{1,0:T(1,128)}', space=vmem, size = 0x12000, scoped, tag = 'internal scratch']
  %s0 = inlined_call_operand.hbm [shape: f32[8,128], index: 0, kind: input, shape index: {}]
  %s1 = inlined_call_operand.hbm [shape: f32[8,128], index: 1, kind: output, shape index: {}]
  %s2 = sld [smem:[#allocation0]]
  $region18: #{tpu_custom_call.1} parent=0
    _
  %s4 = ssub.s32 1, %s2
  %s5 = scalar_select 0, %s4, %s2
  $region1: #{tpu_custom_call.1} parent=0
    #allocation2 [shape = 'u8[4096]{0}', space=vmem, size = 0x1000, scoped, tag = 'input window, operand 0, single buffered']
    #allocation3 [shape = 's32[1]{0}', space=sflag, size = 0x4, scoped, tag = 'scoped memory for tpu_custom_call.1']
    #allocation4 [shape = 's32[1]{0}', space=sflag, size = 0x4, scoped, tag = 'scoped memory for tpu_custom_call.1']
    #allocation5 [shape = 'u8[4096]{0}', space=vmem, size = 0x1000, scoped, tag = 'output window, operand 0, single buffered']
    %6 = vsyncpa [#allocation3], 0
    %7 = vsyncpa [#allocation4], 0
    // Predicated region
    $region2: #{tpu_custom_call.1} parent=1 // pred_check
      _
    $region3: #{tpu_custom_call.1} parent=1 // pred_check_branch
      %9 = sbr.rel (0) target = $region5
    $region4: #{tpu_custom_call.1} parent=1 // pred_region
      %s11 = ssub.s32 128, 128
      %12 = vsyncadd [#allocation3], %s11
      %s14 = sshll.u32 [#allocation2], 4
      %s15 = int_to_ptr.vmem [resolvable:$true] %s14
      %17 = dma.hbm_to_vmem [thread:$0]  %s0, 128, %s15, [#allocation3]
    $region5: #{tpu_custom_call.1} parent=1 // pred_fallthru
      _
    // Predicated region
    $region6: #{tpu_custom_call.1} parent=1 // pred_check
      _
    $region7: #{tpu_custom_call.1} parent=1 // pred_check_branch
      %19 = sbr.rel (0) target = $region9
    $region8: #{tpu_custom_call.1} parent=1 // pred_region
      %20 = dma.done [#allocation3], 128
    $region9: #{tpu_custom_call.1} parent=1 // pred_fallthru
      _
    %v21 = vld [vmem:[#allocation2] sm:$0xff]
    %v22 = verf.f32.pop %v21
    %23 = vst [vmem:[#allocation5] sm:$0xff] %v22
    // Predicated region
    $region10: #{tpu_custom_call.1} parent=1 // pred_check
      _
    $region11: #{tpu_custom_call.1} parent=1 // pred_check_branch
      %25 = sbr.rel (0) target = $region13
    $region12: #{tpu_custom_call.1} parent=1 // pred_region
      %s27 = ssub.s32 128, 128
      %28 = vsyncadd [#allocation4], %s27
      %s30 = sshll.u32 [#allocation5], 4
      %s31 = int_to_ptr.vmem [resolvable:$true] %s30
      %33 = dma.vmem_to_hbm [thread:$0]  %s31, 128, %s1, [#allocation4]
    $region13: #{tpu_custom_call.1} parent=1 // pred_fallthru
      _
    // Predicated region
    $region14: #{tpu_custom_call.1} parent=1 // pred_check
      _
    $region15: #{tpu_custom_call.1} parent=1 // pred_check_branch
      %35 = sbr.rel (0) target = $region17
    $region16: #{tpu_custom_call.1} parent=1 // pred_region
      %36 = dma.done [#allocation4], 128
    $region17: #{tpu_custom_call.1} parent=1 // pred_fallthru
      _
    %37 = vsyncpa [#allocation3], 1
    %38 = vsyncpa [#allocation4], 1

// kernel: tpu_custom_call.1
$region0: #{tpu_custom_call.1}
  #allocation0 [shape = 'u32[]', space=smem, size = 0x4, offset = 0x4, fixed_abs, tag = 'smem constant byte address 0x4 - core index']
  #allocation1 [shape = 'u32[144,128]{1,0:T(1,128)}', space=vmem, size = 0x12000, scoped, tag = 'internal scratch']
  %s0 = inlined_call_operand.vmem [shape: f32[128,48], index: 0, kind: input, shape index: {}]
  %s1 = inlined_call_operand.vmem [shape: bf16[48,16], index: 1, kind: input, shape index: {}]
  %s2 = inlined_call_operand.vmem [shape: f32[1,16], index: 2, kind: input, shape index: {}]
  %s3 = inlined_call_operand.vmem [shape: f32[1,16], index: 3, kind: input, shape index: {}]
  %s4 = inlined_call_operand.vmem [shape: f32[1,16], index: 4, kind: input, shape index: {}]
  %s5 = inlined_call_operand.vmem [shape: f32[128,16], index: 5, kind: output, shape index: {}]
  %s6 = sld [smem:[#allocation0]]
  $region30: #{tpu_custom_call.1} parent=0
    _
  %s8 = ssub.s32 1, %s6
  %s9 = scalar_select 0, %s8, %s6
  // Predicated region
  $region2: #{tpu_custom_call.1} parent=0 // pred_check
    _
  $region3: #{tpu_custom_call.1} parent=0 // pred_check_branch
    %11 = sbr.rel (0) target = $region5
  $region4: #{tpu_custom_call.1} parent=0 // pred_region
    _
  $region5: #{tpu_custom_call.1} parent=0 // pred_fallthru
    _
  // Predicated region
  $region6: #{tpu_custom_call.1} parent=0 // pred_check
    _
  $region7: #{tpu_custom_call.1} parent=0 // pred_check_branch
    %13 = sbr.rel (0) target = $region9
  $region8: #{tpu_custom_call.1} parent=0 // pred_region
    _
  $region9: #{tpu_custom_call.1} parent=0 // pred_fallthru
    _
  // Predicated region
  $region10: #{tpu_custom_call.1} parent=0 // pred_check
    _
  $region11: #{tpu_custom_call.1} parent=0 // pred_check_branch
    %15 = sbr.rel (0) target = $region13
  $region12: #{tpu_custom_call.1} parent=0 // pred_region
    _
  $region13: #{tpu_custom_call.1} parent=0 // pred_fallthru
    _
  // Predicated region
  $region14: #{tpu_custom_call.1} parent=0 // pred_check
    _
  $region15: #{tpu_custom_call.1} parent=0 // pred_check_branch
    %17 = sbr.rel (0) target = $region17
  $region16: #{tpu_custom_call.1} parent=0 // pred_region
    _
  $region17: #{tpu_custom_call.1} parent=0 // pred_fallthru
    _
  // Predicated region
  $region18: #{tpu_custom_call.1} parent=0 // pred_check
    _
  $region19: #{tpu_custom_call.1} parent=0 // pred_check_branch
    %19 = sbr.rel (0) target = $region21
  $region20: #{tpu_custom_call.1} parent=0 // pred_region
    _
  $region21: #{tpu_custom_call.1} parent=0 // pred_fallthru
    _
  %v21 = vld [vmem:[%s0] sm:$0xff]
  %v22 = vld [vmem:[%s0 + $0x8] sm:$0xff]
  %v23 = vld [vmem:[%s0 + $0x10] sm:$0xff]
  %v24 = vld [vmem:[%s0 + $0x18] sm:$0xff]
  %v25 = vld [vmem:[%s0 + $0x20] sm:$0xff]
  %v26 = vld [vmem:[%s0 + $0x28] sm:$0xff]
  %v27 = vld [vmem:[%s0 + $0x30] sm:$0xff]
  %v28 = vld [vmem:[%s0 + $0x38] sm:$0xff]
  %v29 = vld [vmem:[%s0 + $0x40] sm:$0xff]
  %v30 = vld [vmem:[%s0 + $0x48] sm:$0xff]
  %v31 = vld [vmem:[%s0 + $0x50] sm:$0xff]
  %v32 = vld [vmem:[%s0 + $0x58] sm:$0xff]
  %v33 = vld [vmem:[%s0 + $0x60] sm:$0xff]
  %v34 = vld [vmem:[%s0 + $0x68] sm:$0xff]
  %v35 = vld [vmem:[%s0 + $0x70] sm:$0xff]
  %v36 = vld [vmem:[%s0 + $0x78] sm:$0xff]
  %v37 = vpack.c.bf16 %v22, %v21
  %v38 = vpack.c.bf16 %v24, %v23
  %v39 = vpack.c.bf16 %v26, %v25
  %v40 = vpack.c.bf16 %v28, %v27
  %v41 = vpack.c.bf16 %v30, %v29
  %v42 = vpack.c.bf16 %v32, %v31
  %v43 = vpack.c.bf16 %v34, %v33
  %v44 = vpack.c.bf16 %v36, %v35
  %v45 = vld [vmem:[%s1] sm:$0xf]
  %v46 = vld [vmem:[%s1 + $0x4] sm:$0xf]
  %v47 = vld [vmem:[%s1 + $0x8] sm:$0xf]
  %v48 = vld [vmem:[%s1 + $0xc] sm:$0xf]
  %v49 = vld [vmem:[%s1 + $0x10] sm:$0xf]
  %v50 = vld [vmem:[%s1 + $0x14] sm:$0xf]
  %v51 = vld [vmem:[%s2] sm:$0x1]
  %v53 = vlaneseq
  %v54 = vshrl.u32 %v53, 7
  %v55 = vsub.s32 0, %v54
  %v56 = vrot.slane %v51, %v55
  %v64 = vunpack.c.l.b16 %v45
  %v65 = vunpack.c.l.b16 %v46
  %v66 = vunpack.c.l.b16 %v47
  %v67 = vunpack.c.l.b16 %v48
  %v68 = vunpack.c.l.b16 %v49
  %v69 = vunpack.c.l.b16 %v50
  %v70 = vpack.c.b16 %v65, %v64
  %v71 = vpack.c.b16 %v67, %v66
  %v72 = vpack.c.b16 %v69, %v68
  %vm76 = vcmask 392192
  %v78 = vsel %vm76, %v37, 0
  %v81 = vsel %vm76, %v38, 0
  %v84 = vsel %vm76, %v39, 0
  %v87 = vsel %vm76, %v40, 0
  %v90 = vsel %vm76, %v41, 0
  %v93 = vsel %vm76, %v42, 0
  %v96 = vsel %vm76, %v43, 0
  %v99 = vsel %vm76, %v44, 0
  %101 = vmatprep.subr.bf16.mxu0 0
  %102 = vmatpush1.bf16.msra.mxu0 %v70
  %103 = vmatprep.subr.bf16.mxu0 0
  %104 = vmatpush1.bf16.msra.mxu0 %v71
  %105 = vmatprep.subr.bf16.mxu0 0
  %106 = vmatpush1.bf16.msra.mxu0 %v72
  %107 = vmatprep.subr.bf16.mxu0 0
  %108 = vmatpush1.bf16.msra.mxu0 0
  %109 = vmatprep.subr.bf16.mxu0 0
  %110 = vmatpush1.bf16.msra.mxu0 0
  %111 = vmatprep.subr.bf16.mxu0 0
  %112 = vmatpush1.bf16.msra.mxu0 0
  %113 = vmatprep.subr.bf16.mxu0 0
  %114 = vmatpush1.bf16.msra.mxu0 0
  %115 = vmatprep.subr.bf16.mxu0 0
  %116 = vmatpush1.bf16.msra.mxu0 0
  %117 = vmatprep.subr.bf16.mxu0 0
  %118 = vmatpush1.bf16.msra.mxu0 0
  %119 = vmatprep.subr.bf16.mxu0 0
  %120 = vmatpush1.bf16.msra.mxu0 0
  %121 = vmatprep.subr.bf16.mxu0 0
  %122 = vmatpush1.bf16.msra.mxu0 0
  %123 = vmatprep.subr.bf16.mxu0 0
  %124 = vmatpush1.bf16.msra.mxu0 0
  %125 = vmatprep.subr.bf16.mxu0 0
  %126 = vmatpush1.bf16.msra.mxu0 0
  %127 = vmatprep.subr.bf16.mxu0 0
  %128 = vmatpush1.bf16.msra.mxu0 0
  %129 = vmatprep.subr.bf16.mxu0 0
  %130 = vmatpush1.bf16.msra.mxu0 0
  %131 = vmatprep.subr.bf16.mxu0 0
  %132 = vmatpush1.bf16.msra.mxu0 0
  %133 = vmatprep.mubr.bf16.mxu0 0
  %134 = vmatmul.mubr.bf16.gmra.mrb[0].mxu0 %v78
  %v135 = vpop.f32.mrb[0].mxu0
  %v136 = vadd.f32 %v56, %v135
  %v137 = vpop.f32.mrb[0].mxu0
  %v138 = vpop.f32.mrb[0].mxu0
  %v139 = vadd.f32 %v56, %v138
  %v140 = vpop.f32.mrb[0].mxu0
  %141 = vmatprep.mubr.bf16.mxu0 0
  %142 = vmatmul.mubr.bf16.gmra.mrb[0].mxu0 %v81
  %v143 = vpop.f32.mrb[0].mxu0
  %v144 = vadd.f32 %v56, %v143
  %v145 = vpop.f32.mrb[0].mxu0
  %v146 = vpop.f32.mrb[0].mxu0
  %v147 = vadd.f32 %v56, %v146
  %v148 = vpop.f32.mrb[0].mxu0
  %149 = vmatprep.mubr.bf16.mxu0 0
  %150 = vmatmul.mubr.bf16.gmra.mrb[0].mxu0 %v84
  %v151 = vpop.f32.mrb[0].mxu0
  %v152 = vadd.f32 %v56, %v151
  %v153 = vpop.f32.mrb[0].mxu0
  %v154 = vpop.f32.mrb[0].mxu0
  %v155 = vadd.f32 %v56, %v154
  %v156 = vpop.f32.mrb[0].mxu0
  %157 = vmatprep.mubr.bf16.mxu0 0
  %158 = vmatmul.mubr.bf16.gmra.mrb[0].mxu0 %v87
  %v159 = vpop.f32.mrb[0].mxu0
  %v160 = vadd.f32 %v56, %v159
  %v161 = vpop.f32.mrb[0].mxu0
  %v162 = vpop.f32.mrb[0].mxu0
  %v163 = vadd.f32 %v56, %v162
  %v164 = vpop.f32.mrb[0].mxu0
  %165 = vmatprep.mubr.bf16.mxu0 0
  %166 = vmatmul.mubr.bf16.gmra.mrb[0].mxu0 %v90
  %v167 = vpop.f32.mrb[0].mxu0
  %v168 = vadd.f32 %v56, %v167
  %v169 = vpop.f32.mrb[0].mxu0
  %v170 = vpop.f32.mrb[0].mxu0
  %v171 = vadd.f32 %v56, %v170
  %v172 = vpop.f32.mrb[0].mxu0
  %173 = vmatprep.mubr.bf16.mxu0 0
  %174 = vmatmul.mubr.bf16.gmra.mrb[0].mxu0 %v93
  %v175 = vpop.f32.mrb[0].mxu0
  %v176 = vadd.f32 %v56, %v175
  %v177 = vpop.f32.mrb[0].mxu0
  %v178 = vpop.f32.mrb[0].mxu0
  %v179 = vadd.f32 %v56, %v178
  %v180 = vpop.f32.mrb[0].mxu0
  %181 = vmatprep.mubr.bf16.mxu0 0
  %182 = vmatmul.mubr.bf16.gmra.mrb[0].mxu0 %v96
  %v183 = vpop.f32.mrb[0].mxu0
  %v184 = vadd.f32 %v56, %v183
  %v185 = vpop.f32.mrb[0].mxu0
  %v186 = vpop.f32.mrb[0].mxu0
  %v187 = vadd.f32 %v56, %v186
  %v188 = vpop.f32.mrb[0].mxu0
  %189 = vmatprep.mubr.bf16.mxu0 0
  %190 = vmatmul.mubr.bf16.gmra.mrb[0].mxu0 %v99
  %v191 = vpop.f32.mrb[0].mxu0
  %v192 = vadd.f32 %v56, %v191
  %v193 = vpop.f32.mrb[0].mxu0
  %v194 = vpop.f32.mrb[0].mxu0
  %v195 = vadd.f32 %v56, %v194
  %v196 = vpop.f32.mrb[0].mxu0
  %197 = vdwg.mxu0
  %vm198 = vcmask 130048
  %v199 = vsel %vm198, %v136, 0.0
  %200 = vadd.xlane.f32.xlu0 %v199
  %v201 = vpop.xlane.xlu0 %200
  %v202 = vsel %vm198, %v139, 0.0
  %203 = vadd.xlane.f32.xlu0 %v202
  %v204 = vpop.xlane.xlu0 %203
  %v205 = vsel %vm198, %v144, 0.0
  %206 = vadd.xlane.f32.xlu0 %v205
  %v207 = vpop.xlane.xlu0 %206
  %v208 = vsel %vm198, %v147, 0.0
  %209 = vadd.xlane.f32.xlu0 %v208
  %v210 = vpop.xlane.xlu0 %209
  %v211 = vsel %vm198, %v152, 0.0
  %212 = vadd.xlane.f32.xlu0 %v211
  %v213 = vpop.xlane.xlu0 %212
  %v214 = vsel %vm198, %v155, 0.0
  %215 = vadd.xlane.f32.xlu0 %v214
  %v216 = vpop.xlane.xlu0 %215
  %v217 = vsel %vm198, %v160, 0.0
  %218 = vadd.xlane.f32.xlu0 %v217
  %v219 = vpop.xlane.xlu0 %218
  %v220 = vsel %vm198, %v163, 0.0
  %221 = vadd.xlane.f32.xlu0 %v220
  %v222 = vpop.xlane.xlu0 %221
  %v223 = vsel %vm198, %v168, 0.0
  %224 = vadd.xlane.f32.xlu0 %v223
  %v225 = vpop.xlane.xlu0 %224
  %v226 = vsel %vm198, %v171, 0.0
  %227 = vadd.xlane.f32.xlu0 %v226
  %v228 = vpop.xlane.xlu0 %227
  %v229 = vsel %vm198, %v176, 0.0
  %230 = vadd.xlane.f32.xlu0 %v229
  %v231 = vpop.xlane.xlu0 %230
  %v232 = vsel %vm198, %v179, 0.0
  %233 = vadd.xlane.f32.xlu0 %v232
  %v234 = vpop.xlane.xlu0 %233
  %v235 = vsel %vm198, %v184, 0.0
  %236 = vadd.xlane.f32.xlu0 %v235
  %v237 = vpop.xlane.xlu0 %236
  %v238 = vsel %vm198, %v187, 0.0
  %239 = vadd.xlane.f32.xlu0 %v238
  %v240 = vpop.xlane.xlu0 %239
  %v241 = vsel %vm198, %v192, 0.0
  %242 = vadd.xlane.f32.xlu0 %v241
  %v243 = vpop.xlane.xlu0 %242
  %v244 = vsel %vm198, %v195, 0.0
  %245 = vadd.xlane.f32.xlu0 %v244
  %v246 = vpop.xlane.xlu0 %245
  %v247 = vrcp.pop 16.0
  %v248 = vmul.f32 %v201, %v247
  %v249 = vmul.f32 %v204, %v247
  %v250 = vmul.f32 %v207, %v247
  %v251 = vmul.f32 %v210, %v247
  %v252 = vmul.f32 %v213, %v247
  %v253 = vmul.f32 %v216, %v247
  %v254 = vmul.f32 %v219, %v247
  %v255 = vmul.f32 %v222, %v247
  %v256 = vmul.f32 %v225, %v247
  %v257 = vmul.f32 %v228, %v247
  %v258 = vmul.f32 %v231, %v247
  %v259 = vmul.f32 %v234, %v247
  %v260 = vmul.f32 %v237, %v247
  %v261 = vmul.f32 %v240, %v247
  %v262 = vmul.f32 %v243, %v247
  %v263 = vmul.f32 %v246, %v247
  %v264 = vsub.f32 %v136, %v248
  %v265 = vsub.f32 %v139, %v249
  %v266 = vsub.f32 %v144, %v250
  %v267 = vsub.f32 %v147, %v251
  %v268 = vsub.f32 %v152, %v252
  %v269 = vsub.f32 %v155, %v253
  %v270 = vsub.f32 %v160, %v254
  %v271 = vsub.f32 %v163, %v255
  %v272 = vsub.f32 %v168, %v256
  %v273 = vsub.f32 %v171, %v257
  %v274 = vsub.f32 %v176, %v258
  %v275 = vsub.f32 %v179, %v259
  %v276 = vsub.f32 %v184, %v260
  %v277 = vsub.f32 %v187, %v261
  %v278 = vsub.f32 %v192, %v262
  %v279 = vsub.f32 %v195, %v263
  %v280 = vmul.f32 %v264, %v264
  %v281 = vmul.f32 %v265, %v265
  %v282 = vmul.f32 %v266, %v266
  %v283 = vmul.f32 %v267, %v267
  %v284 = vmul.f32 %v268, %v268
  %v285 = vmul.f32 %v269, %v269
  %v286 = vmul.f32 %v270, %v270
  %v287 = vmul.f32 %v271, %v271
  %v288 = vmul.f32 %v272, %v272
  %v289 = vmul.f32 %v273, %v273
  %v290 = vmul.f32 %v274, %v274
  %v291 = vmul.f32 %v275, %v275
  %v292 = vmul.f32 %v276, %v276
  %v293 = vmul.f32 %v277, %v277
  %v294 = vmul.f32 %v278, %v278
  %v295 = vmul.f32 %v279, %v279
  %v296 = vsel %vm198, %v280, 0.0
  %297 = vadd.xlane.f32.xlu0 %v296
  %v298 = vpop.xlane.xlu0 %297
  %v299 = vsel %vm198, %v281, 0.0
  %300 = vadd.xlane.f32.xlu0 %v299
  %v301 = vpop.xlane.xlu0 %300
  %v302 = vsel %vm198, %v282, 0.0
  %303 = vadd.xlane.f32.xlu0 %v302
  %v304 = vpop.xlane.xlu0 %303
  %v305 = vsel %vm198, %v283, 0.0
  %306 = vadd.xlane.f32.xlu0 %v305
  %v307 = vpop.xlane.xlu0 %306
  %v308 = vsel %vm198, %v284, 0.0
  %309 = vadd.xlane.f32.xlu0 %v308
  %v310 = vpop.xlane.xlu0 %309
  %v311 = vsel %vm198, %v285, 0.0
  %312 = vadd.xlane.f32.xlu0 %v311
  %v313 = vpop.xlane.xlu0 %312
  %v314 = vsel %vm198, %v286, 0.0
  %315 = vadd.xlane.f32.xlu0 %v314
  %v316 = vpop.xlane.xlu0 %315
  %v317 = vsel %vm198, %v287, 0.0
  %318 = vadd.xlane.f32.xlu0 %v317
  %v319 = vpop.xlane.xlu0 %318
  %v320 = vsel %vm198, %v288, 0.0
  %321 = vadd.xlane.f32.xlu0 %v320
  %v322 = vpop.xlane.xlu0 %321
  %v323 = vsel %vm198, %v289, 0.0
  %324 = vadd.xlane.f32.xlu0 %v323
  %v325 = vpop.xlane.xlu0 %324
  %v326 = vsel %vm198, %v290, 0.0
  %327 = vadd.xlane.f32.xlu0 %v326
  %v328 = vpop.xlane.xlu0 %327
  %v329 = vsel %vm198, %v291, 0.0
  %330 = vadd.xlane.f32.xlu0 %v329
  %v331 = vpop.xlane.xlu0 %330
  %v332 = vsel %vm198, %v292, 0.0
  %333 = vadd.xlane.f32.xlu0 %v332
  %v334 = vpop.xlane.xlu0 %333
  %v335 = vsel %vm198, %v293, 0.0
  %336 = vadd.xlane.f32.xlu0 %v335
  %v337 = vpop.xlane.xlu0 %336
  %v338 = vsel %vm198, %v294, 0.0
  %339 = vadd.xlane.f32.xlu0 %v338
  %v340 = vpop.xlane.xlu0 %339
  %v341 = vsel %vm198, %v295, 0.0
  %342 = vadd.xlane.f32.xlu0 %v341
  %v343 = vpop.xlane.xlu0 %342
  %v344 = vmul.f32 %v298, %v247
  %v345 = vmul.f32 %v301, %v247
  %v346 = vmul.f32 %v304, %v247
  %v347 = vmul.f32 %v307, %v247
  %v348 = vmul.f32 %v310, %v247
  %v349 = vmul.f32 %v313, %v247
  %v350 = vmul.f32 %v316, %v247
  %v351 = vmul.f32 %v319, %v247
  %v352 = vmul.f32 %v322, %v247
  %v353 = vmul.f32 %v325, %v247
  %v354 = vmul.f32 %v328, %v247
  %v355 = vmul.f32 %v331, %v247
  %v356 = vmul.f32 %v334, %v247
  %v357 = vmul.f32 %v337, %v247
  %v358 = vmul.f32 %v340, %v247
  %v359 = vmul.f32 %v343, %v247
  %v360 = vadd.f32 %v344, 1e-06
  %v361 = vadd.f32 %v345, 1e-06
  %v362 = vadd.f32 %v346, 1e-06
  %v363 = vadd.f32 %v347, 1e-06
  %v364 = vadd.f32 %v348, 1e-06
  %v365 = vadd.f32 %v349, 1e-06
  %v366 = vadd.f32 %v350, 1e-06
  %v367 = vadd.f32 %v351, 1e-06
  %v368 = vadd.f32 %v352, 1e-06
  %v369 = vadd.f32 %v353, 1e-06
  %v370 = vadd.f32 %v354, 1e-06
  %v371 = vadd.f32 %v355, 1e-06
  %v372 = vadd.f32 %v356, 1e-06
  %v373 = vadd.f32 %v357, 1e-06
  %v374 = vadd.f32 %v358, 1e-06
  %v375 = vadd.f32 %v359, 1e-06
  %v376 = vrsqrt.pop %v360
  %v377 = vrsqrt.pop %v361
  %v378 = vrsqrt.pop %v362
  %v379 = vrsqrt.pop %v363
  %v380 = vrsqrt.pop %v364
  %v381 = vrsqrt.pop %v365
  %v382 = vrsqrt.pop %v366
  %v383 = vrsqrt.pop %v367
  %v384 = vrsqrt.pop %v368
  %v385 = vrsqrt.pop %v369
  %v386 = vrsqrt.pop %v370
  %v387 = vrsqrt.pop %v371
  %v388 = vrsqrt.pop %v372
  %v389 = vrsqrt.pop %v373
  %v390 = vrsqrt.pop %v374
  %v391 = vrsqrt.pop %v375
  %v392 = vmul.f32 %v264, %v376
  %v393 = vmul.f32 %v265, %v377
  %v394 = vmul.f32 %v266, %v378
  %v395 = vmul.f32 %v267, %v379
  %v396 = vmul.f32 %v268, %v380
  %v397 = vmul.f32 %v269, %v381
  %v398 = vmul.f32 %v270, %v382
  %v399 = vmul.f32 %v271, %v383
  %v400 = vmul.f32 %v272, %v384
  %v401 = vmul.f32 %v273, %v385
  %v402 = vmul.f32 %v274, %v386
  %v403 = vmul.f32 %v275, %v387
  %v404 = vmul.f32 %v276, %v388
  %v405 = vmul.f32 %v277, %v389
  %v406 = vmul.f32 %v278, %v390
  %v407 = vmul.f32 %v279, %v391
  %v408 = vld [vmem:[%s3] sm:$0x1]
  %v410 = vlaneseq
  %v411 = vshrl.u32 %v410, 7
  %v412 = vsub.s32 0, %v411
  %v413 = vrot.slane %v408, %v412
  %v415 = vmul.f32 %v392, %v413
  %v416 = vmul.f32 %v393, %v413
  %v417 = vmul.f32 %v394, %v413
  %v418 = vmul.f32 %v395, %v413
  %v419 = vmul.f32 %v396, %v413
  %v420 = vmul.f32 %v397, %v413
  %v421 = vmul.f32 %v398, %v413
  %v422 = vmul.f32 %v399, %v413
  %v423 = vmul.f32 %v400, %v413
  %v424 = vmul.f32 %v401, %v413
  %v425 = vmul.f32 %v402, %v413
  %v426 = vmul.f32 %v403, %v413
  %v427 = vmul.f32 %v404, %v413
  %v428 = vmul.f32 %v405, %v413
  %v429 = vmul.f32 %v406, %v413
  %v430 = vmul.f32 %v407, %v413
  %v431 = vld [vmem:[%s4] sm:$0x1]
  %v433 = vlaneseq
  %v434 = vshrl.u32 %v433, 7
  %v435 = vsub.s32 0, %v434
  %v436 = vrot.slane %v431, %v435
  %v438 = vadd.f32 %v415, %v436
  %v439 = vadd.f32 %v416, %v436
  %v440 = vadd.f32 %v417, %v436
  %v441 = vadd.f32 %v418, %v436
  %v442 = vadd.f32 %v419, %v436
  %v443 = vadd.f32 %v420, %v436
  %v444 = vadd.f32 %v421, %v436
  %v445 = vadd.f32 %v422, %v436
  %v446 = vadd.f32 %v423, %v436
  %v447 = vadd.f32 %v424, %v436
  %v448 = vadd.f32 %v425, %v436
  %v449 = vadd.f32 %v426, %v436
  %v450 = vadd.f32 %v427, %v436
  %v451 = vadd.f32 %v428, %v436
  %v452 = vadd.f32 %v429, %v436
  %v453 = vadd.f32 %v430, %v436
  %454 = vst.msk [vmem:[%s5] sm:$0xff] %vm198, %v438
  %455 = vst.msk [vmem:[%s5 + $0x8] sm:$0xff] %vm198, %v439
  %456 = vst.msk [vmem:[%s5 + $0x10] sm:$0xff] %vm198, %v440
  %457 = vst.msk [vmem:[%s5 + $0x18] sm:$0xff] %vm198, %v441
  %458 = vst.msk [vmem:[%s5 + $0x20] sm:$0xff] %vm198, %v442
  %459 = vst.msk [vmem:[%s5 + $0x28] sm:$0xff] %vm198, %v443
  %460 = vst.msk [vmem:[%s5 + $0x30] sm:$0xff] %vm198, %v444
  %461 = vst.msk [vmem:[%s5 + $0x38] sm:$0xff] %vm198, %v445
  %462 = vst.msk [vmem:[%s5 + $0x40] sm:$0xff] %vm198, %v446
  %463 = vst.msk [vmem:[%s5 + $0x48] sm:$0xff] %vm198, %v447
  %464 = vst.msk [vmem:[%s5 + $0x50] sm:$0xff] %vm198, %v448
  %465 = vst.msk [vmem:[%s5 + $0x58] sm:$0xff] %vm198, %v449
  %466 = vst.msk [vmem:[%s5 + $0x60] sm:$0xff] %vm198, %v450
  %467 = vst.msk [vmem:[%s5 + $0x68] sm:$0xff] %vm198, %v451
  %468 = vst.msk [vmem:[%s5 + $0x70] sm:$0xff] %vm198, %v452
  %469 = vst.msk [vmem:[%s5 + $0x78] sm:$0xff] %vm198, %v453
  // Predicated region
  $region22: #{tpu_custom_call.1} parent=0 // pred_check
    _
  $region23: #{tpu_custom_call.1} parent=0 // pred_check_branch
    %471 = sbr.rel (0) target = $region25
  $region24: #{tpu_custom_call.1} parent=0 // pred_region
    _
  $region25: #{tpu_custom_call.1} parent=0 // pred_fallthru
    _
  // Predicated region
  $region26: #{tpu_custom_call.1} parent=0 // pred_check
    _
  $region27: #{tpu_custom_call.1} parent=0 // pred_check_branch
    %473 = sbr.rel (0) target = $region29
  $region28: #{tpu_custom_call.1} parent=0 // pred_region
    _
  $region29: #{tpu_custom_call.1} parent=0 // pred_fallthru
    _

</llo_original>
